<compile_context>
chip_gen: v7x
topology: tpu7x:2x2x1
jax: 0.10.0
libtpu: 0.0.40
codegen_flags: <defaults>
</compile_context>

<pallas_src>
import jax
import jax.numpy as jnp
from jax.experimental import pallas as pl
from jax.experimental.pallas import tpu as pltpu


# ----------------------------------------------------------------------------
# Helpers
# ----------------------------------------------------------------------------
_VMEM_BUDGET_BYTES = 24 * 1024 * 1024   # conservative across v5e / v6e / v7x
_VMEM_LIMIT_BYTES = 32 * 1024 * 1024    # raise v5e's 16 MiB scoped default


def _round_up(x, m):
    return ((x + m - 1) // m) * m


def _pick_batch_tile(n, row_bytes, resident_bytes,
                     budget=_VMEM_BUDGET_BYTES, max_tile=512):
    """Largest multiple-of-8 batch tile whose double-buffered activation
    stream plus resident weights fits the VMEM budget."""
    tn = max_tile
    while tn > 8 and resident_bytes + 2 * tn * row_bytes > budget:
        tn //= 2
    if n <= tn:
        return n          # single block covering the whole (small) batch
    return tn             # multiple of 8; partial last tile handled by Pallas


# ----------------------------------------------------------------------------
# Kernels
# ----------------------------------------------------------------------------
def _classify_kernel(x_ref, w1_ref, b1_ref, w2_ref, b2_ref, out_ref):
    """Fused: temporal mean -> Linear (BN folded) -> ReLU -> Linear."""
    x = x_ref[...].astype(jnp.float32)                # (TN, T, F)
    inv_t = 1.0 / x.shape[1]
    avg = jnp.sum(x, axis=1) * inv_t                  # (TN, F), f32 accumulation

    # embedding linear with BN(eval) pre-folded into w1/b1
    h = jnp.dot(avg, w1_ref[...], preferred_element_type=jnp.float32)
    h = h + b1_ref[...]
    h = jnp.maximum(h, 0.0)                           # ReLU

    # classifier linear (lane-dense padded C)
    out = jnp.dot(h, w2_ref[...], preferred_element_type=jnp.float32)
    out_ref[...] = (out + b2_ref[...]).astype(out_ref.dtype)


def _feature_kernel(x_ref, out_ref):
    """Fused: temporal mean -> L2 normalize along feature dim."""
    x = x_ref[...].astype(jnp.float32)                # (TN, T, F)
    inv_t = 1.0 / x.shape[1]
    avg = jnp.sum(x, axis=1) * inv_t                  # (TN, F)
    sq = jnp.sum(avg * avg, axis=1, keepdims=True)    # (TN, 1)
    # rsqrt on the EUP slot; == 1 / max(||avg||, 1e-12)  (F.normalize eps)
    inv_norm = jax.lax.rsqrt(jnp.maximum(sq, 1e-24))
    out_ref[...] = (avg * inv_norm).astype(out_ref.dtype)


# ----------------------------------------------------------------------------
# Wrapper / module
# ----------------------------------------------------------------------------
class AvgPoolingPallas:
    def __init__(self, input_feature_size, num_classes, mode,
                 embeding_fea_size=1024, dropout=0.5, key=None):
        is_output_feature = {"Dissimilarity": True, "Classification": False}
        self.is_output_feature = is_output_feature[mode]
        self.training = False
        self.dropout = dropout

        if key is None:
            key = jax.random.PRNGKey(0)
        k1, k2 = jax.random.split(key)

        F_in, E, C = input_feature_size, embeding_fea_size, num_classes

        # nn.Linear(input_feature_size, embeding_fea_size),
        # kaiming_normal_(mode='fan_out') -> std = sqrt(2 / fan_out) = sqrt(2/E)
        self.embed_w = (jax.random.normal(k1, (E, F_in), jnp.float32)
                        * jnp.sqrt(2.0 / E))                 # (out, in)
        self.embed_b = jnp.zeros((E,), jnp.float32)

        # BatchNorm1d(E): weight=1, bias=0, running_mean=0, running_var=1
        self.bn_gamma = jnp.ones((E,), jnp.float32)
        self.bn_beta = jnp.zeros((E,), jnp.float32)
        self.bn_rmean = jnp.zeros((E,), jnp.float32)
        self.bn_rvar = jnp.ones((E,), jnp.float32)
        self.bn_eps = 1e-5

        # nn.Linear(E, num_classes), normal_(std=0.001), bias=0
        self.cls_w = jax.random.normal(k2, (C, E), jnp.float32) * 0.001
        self.cls_b = jnp.zeros((C,), jnp.float32)

        self.F_in, self.E, self.C = F_in, E, C

    # -- parameter preparation (glue): fold BN, transpose, pad to 128 lanes --
    def _folded_padded_params(self):
        F_in, E, C = self.F_in, self.E, self.C
        E_pad = _round_up(E, 128)
        C_pad = _round_up(C, 128)

        scale = self.bn_gamma * jax.lax.rsqrt(self.bn_rvar + self.bn_eps)   # (E,)
        w1f = self.embed_w.T * scale[None, :]                               # (F, E)
        b1f = (self.embed_b - self.bn_rmean) * scale + self.bn_beta         # (E,)

        w1p = jnp.zeros((F_in, E_pad), jnp.float32).at[:, :E].set(w1f)
        b1p = jnp.zeros((1, E_pad), jnp.float32).at[:, :E].set(b1f)
        w2p = jnp.zeros((E_pad, C_pad), jnp.float32).at[:E, :C].set(self.cls_w.T)
        b2p = jnp.zeros((1, C_pad), jnp.float32).at[:, :C].set(self.cls_b)
        return w1p, b1p, w2p, b2p, E_pad, C_pad

    def __call__(self, inputs):
        N, T, F_in = inputs.shape
        itemsize = jnp.dtype(inputs.dtype).itemsize
        cparams = pltpu.CompilerParams(
            dimension_semantics=("parallel",),
            vmem_limit_bytes=_VMEM_LIMIT_BYTES,
        )

        if (not self.training) and self.is_output_feature:
            # eval + Dissimilarity -> L2-normalized pooled features
            row_bytes = T * F_in * itemsize + F_in * 4
            tn = _pick_batch_tile(N, row_bytes, resident_bytes=0)
            grid = (pl.cdiv(N, tn),)
            return pl.pallas_call(
                _feature_kernel,
                out_shape=jax.ShapeDtypeStruct((N, F_in), inputs.dtype),
                grid=grid,
                in_specs=[pl.BlockSpec((tn, T, F_in), lambda i: (i, 0, 0))],
                out_specs=pl.BlockSpec((tn, F_in), lambda i: (i, 0)),
                compiler_params=cparams,
            )(inputs)

        # Classification path (dropout = identity in eval mode)
        C = self.C
        w1p, b1p, w2p, b2p, E_pad, C_pad = self._folded_padded_params()

        # resident weight/bias bytes (counted double-buffered to be safe)
        resident = 2 * 4 * (F_in * E_pad + E_pad * C_pad + E_pad + C_pad)
        row_bytes = T * F_in * itemsize + C_pad * 4
        tn = _pick_batch_tile(N, row_bytes, resident)
        grid = (pl.cdiv(N, tn),)

        logits_padded = pl.pallas_call(
            _classify_kernel,
            out_shape=jax.ShapeDtypeStruct((N, C_pad), jnp.float32),
            grid=grid,
            in_specs=[
                pl.BlockSpec((tn, T, F_in), lambda i: (i, 0, 0)),   # activations
                pl.BlockSpec((F_in, E_pad), lambda i: (0, 0)),      # resident w1
                pl.BlockSpec((1, E_pad), lambda i: (0, 0)),         # resident b1
                pl.BlockSpec((E_pad, C_pad), lambda i: (0, 0)),     # resident w2
                pl.BlockSpec((1, C_pad), lambda i: (0, 0)),         # resident b2
            ],
            out_specs=pl.BlockSpec((tn, C_pad), lambda i: (i, 0)),
            compiler_params=cparams,
        )(inputs, w1p, b1p, w2p, b2p)

        return logits_padded[:, :C]


# ----------------------------------------------------------------------------
# Demo / check
# ----------------------------------------------------------------------------
if __name__ == "__main__":
    key = jax.random.PRNGKey(0)
    kx, kp = jax.random.split(key)

    N, T, F_in = 4, 8, 32
    E, C = 128, 16
    x = jax.random.normal(kx, (N, T, F_in), jnp.float32)

    # Classification mode -> logits
    model_cls = AvgPoolingPallas(F_in, C, mode="Classification",
                                 embeding_fea_size=E, key=kp)
    logits = model_cls(x)
    jax.block_until_ready(logits)

    # Pure-JAX reference for the classification path (unfolded BN, eval stats)
    avg = jnp.mean(x, axis=1)
    h = avg @ model_cls.embed_w.T + model_cls.embed_b
    h = ((h - model_cls.bn_rmean) / jnp.sqrt(model_cls.bn_rvar + 1e-5)
         * model_cls.bn_gamma + model_cls.bn_beta)
    h = jnp.maximum(h, 0.0)
    ref_logits = h @ model_cls.cls_w.T + model_cls.cls_b
    assert logits.shape == (N, C)
    assert jnp.allclose(logits, ref_logits, atol=1e-4, rtol=1e-4)

    # Dissimilarity mode (eval) -> L2-normalized pooled features
    model_feat = AvgPoolingPallas(F_in, C, mode="Dissimilarity",
                                  embeding_fea_size=E, key=kp)
    feats = model_feat(x)
    jax.block_until_ready(feats)

    ref_feats = avg / jnp.maximum(
        jnp.linalg.norm(avg, axis=1, keepdims=True), 1e-12)
    assert feats.shape == (N, F_in)
    assert jnp.allclose(feats, ref_feats, atol=1e-5, rtol=1e-5)

    print("KERNEL_OK")
</pallas_src>

<mosaic_0001>
module attributes {stable_mosaic.version = 11 : i64} {
  func.func @_classify_kernel(%arg0: i32, %arg1: memref<4x8x32xf32, #tpu.memory_space<vmem>>, %arg2: memref<32x128xf32, #tpu.memory_space<vmem>>, %arg3: memref<1x128xf32, #tpu.memory_space<vmem>>, %arg4: memref<128x128xf32, #tpu.memory_space<vmem>>, %arg5: memref<1x128xf32, #tpu.memory_space<vmem>>, %arg6: memref<4x128xf32, #tpu.memory_space<vmem>>) attributes {dimension_semantics = [#tpu.dimension_semantics<parallel>], iteration_bounds = array<i64: 1>, scalar_prefetch = 0 : i64, scratch_operands = 0 : i64, tpu.core_type = #tpu.core_type<tc>, window_params = [{transform_indices = @transform_0, window_bounds = array<i64: 4, 8, 32>}, {pipeline_mode = #tpu.pipeline_mode<synchronous>, transform_indices = @transform_1, window_bounds = array<i64: 32, 128>}, {pipeline_mode = #tpu.pipeline_mode<synchronous>, transform_indices = @transform_2, window_bounds = array<i64: 1, 128>}, {pipeline_mode = #tpu.pipeline_mode<synchronous>, transform_indices = @transform_3, window_bounds = array<i64: 128, 128>}, {pipeline_mode = #tpu.pipeline_mode<synchronous>, transform_indices = @transform_4, window_bounds = array<i64: 1, 128>}, {transform_indices = @transform_5, window_bounds = array<i64: 4, 128>}]} {
    %c0 = arith.constant 0 : index
    %c0_0 = arith.constant 0 : index
    %c0_1 = arith.constant 0 : index
    %0 = vector.load %arg1[%c0, %c0_0, %c0_1] : memref<4x8x32xf32, #tpu.memory_space<vmem>>, vector<4x8x32xf32>
    %cst = arith.constant dense<0.000000e+00> : vector<4x32xf32>
    %1 = vector.multi_reduction <add>, %0, %cst [1] : vector<4x8x32xf32> to vector<4x32xf32>
    %cst_2 = arith.constant 1.250000e-01 : f32
    %2 = vector.broadcast %cst_2 : f32 to vector<4x32xf32>
    %3 = arith.mulf %1, %2 : vector<4x32xf32>
    %c0_3 = arith.constant 0 : index
    %c0_4 = arith.constant 0 : index
    %4 = vector.load %arg2[%c0_3, %c0_4] : memref<32x128xf32, #tpu.memory_space<vmem>>, vector<32x128xf32>
    %cst_5 = arith.constant dense<0.000000e+00> : vector<4x128xf32>
    %5 = tpu.matmul %3, %4, %cst_5 {dimension_numbers = #tpu.dot_dimension_numbers<[1], [0], [0], [1], [0, 0, 1, 1], [], []>} : vector<4x32xf32>, vector<32x128xf32>, vector<4x128xf32> -> vector<4x128xf32>
    %c0_6 = arith.constant 0 : index
    %c0_7 = arith.constant 0 : index
    %6 = vector.load %arg3[%c0_6, %c0_7] : memref<1x128xf32, #tpu.memory_space<vmem>>, vector<1x128xf32>
    %7 = vector.broadcast %6 : vector<1x128xf32> to vector<4x128xf32>
    %8 = arith.addf %5, %7 : vector<4x128xf32>
    %cst_8 = arith.constant 0.000000e+00 : f32
    %9 = vector.broadcast %cst_8 : f32 to vector<4x128xf32>
    %10 = arith.maximumf %8, %9 : vector<4x128xf32>
    %c0_9 = arith.constant 0 : index
    %c0_10 = arith.constant 0 : index
    %11 = vector.load %arg4[%c0_9, %c0_10] : memref<128x128xf32, #tpu.memory_space<vmem>>, vector<128x128xf32>
    %cst_11 = arith.constant dense<0.000000e+00> : vector<4x128xf32>
    %12 = tpu.matmul %10, %11, %cst_11 {dimension_numbers = #tpu.dot_dimension_numbers<[1], [0], [0], [1], [0, 0, 1, 1], [], []>} : vector<4x128xf32>, vector<128x128xf32>, vector<4x128xf32> -> vector<4x128xf32>
    %c0_12 = arith.constant 0 : index
    %c0_13 = arith.constant 0 : index
    %13 = vector.load %arg5[%c0_12, %c0_13] : memref<1x128xf32, #tpu.memory_space<vmem>>, vector<1x128xf32>
    %14 = vector.broadcast %13 : vector<1x128xf32> to vector<4x128xf32>
    %15 = arith.addf %12, %14 : vector<4x128xf32>
    %c0_14 = arith.constant 0 : index
    %c0_15 = arith.constant 0 : index
    %16 = vector.load %arg6[%c0_14, %c0_15] : memref<4x128xf32, #tpu.memory_space<vmem>>, vector<4x128xf32>
    tpu.vector_store %arg6[%c0_14, %c0_15], %15 {strides = array<i32>} : memref<4x128xf32, #tpu.memory_space<vmem>>, vector<4x128xf32>,
    return
  }
  func.func @transform_0(%arg0: i32) -> (i32, i32, i32) {
    %c0_i32 = arith.constant 0 : i32
    %c0_i32_0 = arith.constant 0 : i32
    %c0_i32_1 = arith.constant 0 : i32
    return %arg0, %c0_i32, %c0_i32_0 : i32, i32, i32
  }
  func.func @transform_1(%arg0: i32) -> (i32, i32) {
    %c0_i32 = arith.constant 0 : i32
    %c0_i32_0 = arith.constant 0 : i32
    %c0_i32_1 = arith.constant 0 : i32
    return %c0_i32, %c0_i32_0 : i32, i32
  }
  func.func @transform_2(%arg0: i32) -> (i32, i32) {
    %c0_i32 = arith.constant 0 : i32
    %c0_i32_0 = arith.constant 0 : i32
    %c0_i32_1 = arith.constant 0 : i32
    return %c0_i32, %c0_i32_0 : i32, i32
  }
  func.func @transform_3(%arg0: i32) -> (i32, i32) {
    %c0_i32 = arith.constant 0 : i32
    %c0_i32_0 = arith.constant 0 : i32
    %c0_i32_1 = arith.constant 0 : i32
    return %c0_i32, %c0_i32_0 : i32, i32
  }
  func.func @transform_4(%arg0: i32) -> (i32, i32) {
    %c0_i32 = arith.constant 0 : i32
    %c0_i32_0 = arith.constant 0 : i32
    %c0_i32_1 = arith.constant 0 : i32
    return %c0_i32, %c0_i32_0 : i32, i32
  }
  func.func @transform_5(%arg0: i32) -> (i32, i32) {
    %c0_i32 = arith.constant 0 : i32
    %c0_i32_0 = arith.constant 0 : i32
    return %arg0, %c0_i32 : i32, i32
  }
}

</mosaic_0001>

<llo_original>
// kernel: tpu_custom_call.1
$region0: #{tpu_custom_call.1}
  #allocation0 [shape = 'u32[]', space=smem, size = 0x4, offset = 0x4, fixed_abs, tag = 'smem constant byte address 0x4 - core index']
  #allocation1 [shape = 'u32[144,128]{1,0:T(1,128)}', space=vmem, size = 0x12000, scoped, tag = 'internal scratch']
  %s0 = inlined_call_operand.hbm [shape: f32[4,8,32], index: 0, kind: input, shape index: {}]
  %s1 = inlined_call_operand.hbm [shape: f32[32,128], index: 1, kind: input, shape index: {}]
  %s2 = inlined_call_operand.vmem [shape: f32[1,128], index: 2, kind: input, shape index: {}]
  %s3 = inlined_call_operand.hbm [shape: f32[128,128], index: 3, kind: input, shape index: {}]
  %s4 = inlined_call_operand.vmem [shape: f32[1,128], index: 4, kind: input, shape index: {}]
  %s5 = inlined_call_operand.hbm [shape: f32[4,128], index: 5, kind: output, shape index: {}]
  %s6 = sld [smem:[#allocation0]]
  $region42: #{tpu_custom_call.1} parent=0
    _
  %s8 = ssub.s32 1, %s6
  %s9 = scalar_select 0, %s8, %s6
  $region1: #{tpu_custom_call.1} parent=0
    #allocation2 [shape = 'u8[16384]{0}', space=vmem, size = 0x4000, scoped, tag = 'input window, operand 0, single buffered']
    #allocation3 [shape = 's32[1]{0}', space=sflag, size = 0x4, scoped, tag = 'scoped memory for tpu_custom_call.1']
    #allocation4 [shape = 's32[1]{0}', space=sflag, size = 0x4, scoped, tag = 'scoped memory for tpu_custom_call.1']
    #allocation5 [shape = 'u8[16384]{0}', space=vmem, size = 0x4000, scoped, tag = 'input window, operand 1, single buffered']
    #allocation6 [shape = 's32[1]{0}', space=sflag, size = 0x4, scoped, tag = 'scoped memory for tpu_custom_call.1']
    #allocation7 [shape = 'u8[65536]{0}', space=vmem, size = 0x10000, scoped, tag = 'input window, operand 3, single buffered']
    #allocation8 [shape = 'u8[2048]{0}', space=vmem, size = 0x800, scoped, tag = 'output window, operand 0, single buffered']
    %10 = vsyncpa [#allocation3], 0
    %11 = vsyncpa [#allocation6], 0
    %12 = vsyncpa [#allocation4], 0
    // Predicated region
    $region2: #{tpu_custom_call.1} parent=1 // pred_check
      _
    $region3: #{tpu_custom_call.1} parent=1 // pred_check_branch
      %14 = sbr.rel (0) target = $region5
    $region4: #{tpu_custom_call.1} parent=1 // pred_region
      %s16 = ssub.s32 512, 512
      %17 = vsyncadd [#allocation3], %s16
      %s18 = sshll.u32 [#allocation2], 4
      %s19 = int_to_ptr.vmem [resolvable:$true] %s18
      %24 = dma.hbm_to_vmem [thread:$0]  %s0, 512, %s19, [#allocation3], 128, 128, 8
    $region5: #{tpu_custom_call.1} parent=1 // pred_fallthru
      _
    // Predicated region
    $region6: #{tpu_custom_call.1} parent=1 // pred_check
      _
    $region7: #{tpu_custom_call.1} parent=1 // pred_check_branch
      %26 = sbr.rel (0) target = $region9
    $region8: #{tpu_custom_call.1} parent=1 // pred_region
      %s28 = ssub.s32 512, 512
      %29 = vsyncadd [#allocation6], %s28
      %s30 = sshll.u32 [#allocation5], 4
      %s31 = int_to_ptr.vmem [resolvable:$true] %s30
      %36 = dma.hbm_to_vmem [thread:$0]  %s1, 512, %s31, [#allocation6], 128, 128, 8
    $region9: #{tpu_custom_call.1} parent=1 // pred_fallthru
      _
    // Predicated region
    $region10: #{tpu_custom_call.1} parent=1 // pred_check
      _
    $region11: #{tpu_custom_call.1} parent=1 // pred_check_branch
      %38 = sbr.rel (0) target = $region13
    $region12: #{tpu_custom_call.1} parent=1 // pred_region
      _
    $region13: #{tpu_custom_call.1} parent=1 // pred_fallthru
      _
    // Predicated region
    $region14: #{tpu_custom_call.1} parent=1 // pred_check
      _
    $region15: #{tpu_custom_call.1} parent=1 // pred_check_branch
      %40 = sbr.rel (0) target = $region17
    $region16: #{tpu_custom_call.1} parent=1 // pred_region
      %s42 = ssub.s32 2048, 2048
      %43 = vsyncadd [#allocation6], %s42
      %s44 = sshll.u32 [#allocation7], 4
      %s45 = int_to_ptr.vmem [resolvable:$true] %s44
      %50 = dma.hbm_to_vmem [thread:$0]  %s3, 2048, %s45, [#allocation6], 128, 128, 8
    $region17: #{tpu_custom_call.1} parent=1 // pred_fallthru
      _
    // Predicated region
    $region18: #{tpu_custom_call.1} parent=1 // pred_check
      _
    $region19: #{tpu_custom_call.1} parent=1 // pred_check_branch
      %52 = sbr.rel (0) target = $region21
    $region20: #{tpu_custom_call.1} parent=1 // pred_region
      _
    $region21: #{tpu_custom_call.1} parent=1 // pred_fallthru
      _
    // Predicated region
    $region22: #{tpu_custom_call.1} parent=1 // pred_check
      _
    $region23: #{tpu_custom_call.1} parent=1 // pred_check_branch
      %54 = sbr.rel (0) target = $region25
    $region24: #{tpu_custom_call.1} parent=1 // pred_region
      %55 = dma.done [#allocation3], 512
    $region25: #{tpu_custom_call.1} parent=1 // pred_fallthru
      _
    // Predicated region
    $region26: #{tpu_custom_call.1} parent=1 // pred_check
      _
    $region27: #{tpu_custom_call.1} parent=1 // pred_check_branch
      %57 = sbr.rel (0) target = $region29
    $region28: #{tpu_custom_call.1} parent=1 // pred_region
      %58 = dma.done [#allocation6], 512
    $region29: #{tpu_custom_call.1} parent=1 // pred_fallthru
      _
    // Predicated region
    $region30: #{tpu_custom_call.1} parent=1 // pred_check
      _
    $region31: #{tpu_custom_call.1} parent=1 // pred_check_branch
      %60 = sbr.rel (0) target = $region33
    $region32: #{tpu_custom_call.1} parent=1 // pred_region
      %61 = dma.done [#allocation6], 2048
    $region33: #{tpu_custom_call.1} parent=1 // pred_fallthru
      _
    %v62 = vld [vmem:[#allocation2] sm:$0xff]
    %v63 = vld [vmem:[#allocation2 + $0x8] sm:$0xff]
    %v64 = vld [vmem:[#allocation2 + $0x10] sm:$0xff]
    %v65 = vld [vmem:[#allocation2 + $0x18] sm:$0xff]
    %vm66 = vcmask 261120
    %v67 = vsel %vm66, %v62, 0.0
    %v68 = vrot.slane %v67, 4
    %v69 = vadd.f32 %v67, %v68
    %v70 = vrot.slane %v69, 2
    %v71 = vadd.f32 %v69, %v70
    %v72 = vrot.slane %v71, 1
    %v73 = vadd.f32 %v71, %v72
    %v74 = vsel %vm66, %v63, 0.0
    %v75 = vrot.slane %v74, 4
    %v76 = vadd.f32 %v74, %v75
    %v77 = vrot.slane %v76, 2
    %v78 = vadd.f32 %v76, %v77
    %v79 = vrot.slane %v78, 1
    %v80 = vadd.f32 %v78, %v79
    %v81 = vsel %vm66, %v64, 0.0
    %v82 = vrot.slane %v81, 4
    %v83 = vadd.f32 %v81, %v82
    %v84 = vrot.slane %v83, 2
    %v85 = vadd.f32 %v83, %v84
    %v86 = vrot.slane %v85, 1
    %v87 = vadd.f32 %v85, %v86
    %v88 = vsel %vm66, %v65, 0.0
    %v89 = vrot.slane %v88, 4
    %v90 = vadd.f32 %v88, %v89
    %v91 = vrot.slane %v90, 2
    %v92 = vadd.f32 %v90, %v91
    %v93 = vrot.slane %v92, 1
    %v94 = vadd.f32 %v92, %v93
    %v95 = vmul.f32 %v73, 0.125
    %v96 = vmul.f32 %v80, 0.125
    %v97 = vmul.f32 %v87, 0.125
    %v98 = vmul.f32 %v94, 0.125
    %v99 = vld [vmem:[#allocation5] sm:$0xff]
    %v100 = vld [vmem:[#allocation5 + $0x8] sm:$0xff]
    %v101 = vld [vmem:[#allocation5 + $0x10] sm:$0xff]
    %v102 = vld [vmem:[#allocation5 + $0x18] sm:$0xff]
    %v103 = vld [vmem:[%s2] sm:$0x1]
    %v105 = vlaneseq
    %v106 = vshrl.u32 %v105, 7
    %v107 = vsub.s32 0, %v106
    %v108 = vrot.slane %v103, %v107
    %vm114 = vcmask 1041409
    %v115 = vsel %vm114, %v96, %v95
    %vm116 = vcmask 1042434
    %v117 = vsel %vm116, %v97, %v115
    %vm118 = vcmask 1043459
    %v119 = vsel %vm118, %v98, %v117
    %v120 = vsel %vm66, %v119, 0
    %122 = vmatprep.subr.mxu0 0.0
    %123 = vmatpush1.msra.mxu0 %v99
    %124 = vmatprep.subr.mxu0 0.0
    %125 = vmatpush1.msra.mxu0 %v100
    %126 = vmatprep.subr.mxu0 0.0
    %127 = vmatpush1.msra.mxu0 %v101
    %128 = vmatprep.subr.mxu0 0.0
    %129 = vmatpush1.msra.mxu0 %v102
    %130 = vmatprep.subr.mxu0 0.0
    %131 = vmatpush1.msra.mxu0 0.0
    %132 = vmatprep.subr.mxu0 0.0
    %133 = vmatpush1.msra.mxu0 0.0
    %134 = vmatprep.subr.mxu0 0.0
    %135 = vmatpush1.msra.mxu0 0.0
    %136 = vmatprep.subr.mxu0 0.0
    %137 = vmatpush1.msra.mxu0 0.0
    %138 = vmatprep.subr.mxu0 0.0
    %139 = vmatpush1.msra.mxu0 0.0
    %140 = vmatprep.subr.mxu0 0.0
    %141 = vmatpush1.msra.mxu0 0.0
    %142 = vmatprep.subr.mxu0 0.0
    %143 = vmatpush1.msra.mxu0 0.0
    %144 = vmatprep.subr.mxu0 0.0
    %145 = vmatpush1.msra.mxu0 0.0
    %146 = vmatprep.subr.mxu0 0.0
    %147 = vmatpush1.msra.mxu0 0.0
    %148 = vmatprep.subr.mxu0 0.0
    %149 = vmatpush1.msra.mxu0 0.0
    %150 = vmatprep.subr.mxu0 0.0
    %151 = vmatpush1.msra.mxu0 0.0
    %152 = vmatprep.subr.mxu0 0.0
    %153 = vmatpush1.msra.mxu0 0.0
    %154 = vmatprep.subr.mxu0 0.0
    %155 = vmatpush1.msra.mxu0 0.0
    %156 = vmatprep.subr.mxu0 0.0
    %157 = vmatpush1.msra.mxu0 0.0
    %158 = vmatprep.subr.mxu0 0.0
    %159 = vmatpush1.msra.mxu0 0.0
    %160 = vmatprep.subr.mxu0 0.0
    %161 = vmatpush1.msra.mxu0 0.0
    %162 = vmatprep.subr.mxu0 0.0
    %163 = vmatpush1.msra.mxu0 0.0
    %164 = vmatprep.subr.mxu0 0.0
    %165 = vmatpush1.msra.mxu0 0.0
    %166 = vmatprep.subr.mxu0 0.0
    %167 = vmatpush1.msra.mxu0 0.0
    %168 = vmatprep.subr.mxu0 0.0
    %169 = vmatpush1.msra.mxu0 0.0
    %170 = vmatprep.subr.mxu0 0.0
    %171 = vmatpush1.msra.mxu0 0.0
    %172 = vmatprep.subr.mxu0 0.0
    %173 = vmatpush1.msra.mxu0 0.0
    %174 = vmatprep.subr.mxu0 0.0
    %175 = vmatpush1.msra.mxu0 0.0
    %176 = vmatprep.subr.mxu0 0.0
    %177 = vmatpush1.msra.mxu0 0.0
    %178 = vmatprep.subr.mxu0 0.0
    %179 = vmatpush1.msra.mxu0 0.0
    %180 = vmatprep.subr.mxu0 0.0
    %181 = vmatpush1.msra.mxu0 0.0
    %182 = vmatprep.subr.mxu0 0.0
    %183 = vmatpush1.msra.mxu0 0.0
    %184 = vmatprep.subr.mxu0 0.0
    %185 = vmatpush1.msra.mxu0 0.0
    %186 = vmatprep.mubr.f32.mxu0 0.0
    %187 = vmatmul.mubr.f32.gmra.mrb[0].mxu0 %v120
    %v188 = vpop.f32.mrb[0].mxu0
    %v189 = vadd.f32 %v108, %v188
    %v190 = vpop.f32.mrb[0].mxu0
    %191 = vdwg.mxu0
    %v192 = vmax.f32 %v189, 0.0
    %v193 = vld [vmem:[#allocation7] sm:$0xff]
    %v194 = vld [vmem:[#allocation7 + $0x8] sm:$0xff]
    %v195 = vld [vmem:[#allocation7 + $0x10] sm:$0xff]
    %v196 = vld [vmem:[#allocation7 + $0x18] sm:$0xff]
    %v197 = vld [vmem:[#allocation7 + $0x20] sm:$0xff]
    %v198 = vld [vmem:[#allocation7 + $0x28] sm:$0xff]
    %v199 = vld [vmem:[#allocation7 + $0x30] sm:$0xff]
    %v200 = vld [vmem:[#allocation7 + $0x38] sm:$0xff]
    %v201 = vld [vmem:[#allocation7 + $0x40] sm:$0xff]
    %v202 = vld [vmem:[#allocation7 + $0x48] sm:$0xff]
    %v203 = vld [vmem:[#allocation7 + $0x50] sm:$0xff]
    %v204 = vld [vmem:[#allocation7 + $0x58] sm:$0xff]
    %v205 = vld [vmem:[#allocation7 + $0x60] sm:$0xff]
    %v206 = vld [vmem:[#allocation7 + $0x68] sm:$0xff]
    %v207 = vld [vmem:[#allocation7 + $0x70] sm:$0xff]
    %v208 = vld [vmem:[#allocation7 + $0x78] sm:$0xff]
    %v209 = vld [vmem:[%s4] sm:$0x1]
    %v211 = vlaneseq
    %v212 = vshrl.u32 %v211, 7
    %v213 = vsub.s32 0, %v212
    %v214 = vrot.slane %v209, %v213
    %216 = vmatprep.subr.mxu0 0.0
    %217 = vmatpush1.msra.mxu0 %v193
    %218 = vmatprep.subr.mxu0 0.0
    %219 = vmatpush1.msra.mxu0 %v194
    %220 = vmatprep.subr.mxu0 0.0
    %221 = vmatpush1.msra.mxu0 %v195
    %222 = vmatprep.subr.mxu0 0.0
    %223 = vmatpush1.msra.mxu0 %v196
    %224 = vmatprep.subr.mxu0 0.0
    %225 = vmatpush1.msra.mxu0 %v197
    %226 = vmatprep.subr.mxu0 0.0
    %227 = vmatpush1.msra.mxu0 %v198
    %228 = vmatprep.subr.mxu0 0.0
    %229 = vmatpush1.msra.mxu0 %v199
    %230 = vmatprep.subr.mxu0 0.0
    %231 = vmatpush1.msra.mxu0 %v200
    %232 = vmatprep.subr.mxu0 0.0
    %233 = vmatpush1.msra.mxu0 %v201
    %234 = vmatprep.subr.mxu0 0.0
    %235 = vmatpush1.msra.mxu0 %v202
    %236 = vmatprep.subr.mxu0 0.0
    %237 = vmatpush1.msra.mxu0 %v203
    %238 = vmatprep.subr.mxu0 0.0
    %239 = vmatpush1.msra.mxu0 %v204
    %240 = vmatprep.subr.mxu0 0.0
    %241 = vmatpush1.msra.mxu0 %v205
    %242 = vmatprep.subr.mxu0 0.0
    %243 = vmatpush1.msra.mxu0 %v206
    %244 = vmatprep.subr.mxu0 0.0
    %245 = vmatpush1.msra.mxu0 %v207
    %246 = vmatprep.subr.mxu0 0.0
    %247 = vmatpush1.msra.mxu0 %v208
    %248 = vmatprep.subr.mxu0 0.0
    %249 = vmatpush1.msra.mxu0 0.0
    %250 = vmatprep.subr.mxu0 0.0
    %251 = vmatpush1.msra.mxu0 0.0
    %252 = vmatprep.subr.mxu0 0.0
    %253 = vmatpush1.msra.mxu0 0.0
    %254 = vmatprep.subr.mxu0 0.0
    %255 = vmatpush1.msra.mxu0 0.0
    %256 = vmatprep.subr.mxu0 0.0
    %257 = vmatpush1.msra.mxu0 0.0
    %258 = vmatprep.subr.mxu0 0.0
    %259 = vmatpush1.msra.mxu0 0.0
    %260 = vmatprep.subr.mxu0 0.0
    %261 = vmatpush1.msra.mxu0 0.0
    %262 = vmatprep.subr.mxu0 0.0
    %263 = vmatpush1.msra.mxu0 0.0
    %264 = vmatprep.subr.mxu0 0.0
    %265 = vmatpush1.msra.mxu0 0.0
    %266 = vmatprep.subr.mxu0 0.0
    %267 = vmatpush1.msra.mxu0 0.0
    %268 = vmatprep.subr.mxu0 0.0
    %269 = vmatpush1.msra.mxu0 0.0
    %270 = vmatprep.subr.mxu0 0.0
    %271 = vmatpush1.msra.mxu0 0.0
    %272 = vmatprep.subr.mxu0 0.0
    %273 = vmatpush1.msra.mxu0 0.0
    %274 = vmatprep.subr.mxu0 0.0
    %275 = vmatpush1.msra.mxu0 0.0
    %276 = vmatprep.subr.mxu0 0.0
    %277 = vmatpush1.msra.mxu0 0.0
    %278 = vmatprep.subr.mxu0 0.0
    %279 = vmatpush1.msra.mxu0 0.0
    %280 = vmatprep.mubr.f32.mxu0 0.0
    %281 = vmatmul.mubr.f32.gmra.mrb[0].mxu0 %v192
    %v282 = vpop.f32.mrb[0].mxu0
    %v283 = vadd.f32 %v214, %v282
    %v284 = vpop.f32.mrb[0].mxu0
    %285 = vdwg.mxu0
    %286 = vst [vmem:[#allocation8] sm:$0xf] %v283
    // Predicated region
    $region34: #{tpu_custom_call.1} parent=1 // pred_check
      _
    $region35: #{tpu_custom_call.1} parent=1 // pred_check_branch
      %288 = sbr.rel (0) target = $region37
    $region36: #{tpu_custom_call.1} parent=1 // pred_region
      %s290 = ssub.s32 64, 64
      %291 = vsyncadd [#allocation4], %s290
      %s293 = sshll.u32 [#allocation8], 4
      %s294 = int_to_ptr.vmem [resolvable:$true] %s293
      %296 = dma.vmem_to_hbm [thread:$0]  %s294, 64, %s5, [#allocation4]
    $region37: #{tpu_custom_call.1} parent=1 // pred_fallthru
      _
    // Predicated region
    $region38: #{tpu_custom_call.1} parent=1 // pred_check
      _
    $region39: #{tpu_custom_call.1} parent=1 // pred_check_branch
      %298 = sbr.rel (0) target = $region41
    $region40: #{tpu_custom_call.1} parent=1 // pred_region
      %299 = dma.done [#allocation4], 64
    $region41: #{tpu_custom_call.1} parent=1 // pred_fallthru
      _
    %300 = vsyncpa [#allocation3], 1
    %301 = vsyncpa [#allocation6], 1
    %302 = vsyncpa [#allocation4], 1

</llo_original>
